<compile_context>
chip_gen: v7x
topology: tpu7x:2x2x1
jax: 0.10.0
libtpu: 0.0.40
codegen_flags: <defaults>
</compile_context>

<pallas_src>
import functools

import jax
import jax.numpy as jnp
from jax.experimental import pallas as pl
from jax.experimental.pallas import tpu as pltpu

LANE = 128  # lane width / padded hidden & output size


def _round_up(x, m):
    return ((x + m - 1) // m) * m


def mlp_kernel(x_ref, w1_ref, b1_ref, w2_ref, b2_ref, w3_ref, b3_ref,
               w4_ref, b4_ref, o_ref, *, n_classes):
    # Cast the streamed x tile to bf16 in-kernel (caller may pass f32 or bf16).
    x = x_ref[...].astype(jnp.bfloat16)

    # fc1..fc3 + ReLU (bf16 MXU operands, f32 accumulation / elementwise).
    h = jnp.dot(x, w1_ref[...], preferred_element_type=jnp.float32) + b1_ref[...]
    h = jnp.maximum(h, 0.0).astype(jnp.bfloat16)
    h = jnp.dot(h, w2_ref[...], preferred_element_type=jnp.float32) + b2_ref[...]
    h = jnp.maximum(h, 0.0).astype(jnp.bfloat16)
    h = jnp.dot(h, w3_ref[...], preferred_element_type=jnp.float32) + b3_ref[...]
    h = jnp.maximum(h, 0.0).astype(jnp.bfloat16)

    # fc4 (output padded to 128 lanes with zero weight/bias columns).
    logits = jnp.dot(h, w4_ref[...], preferred_element_type=jnp.float32) + b4_ref[...]

    # log_softmax over the first n_classes columns only (pad columns masked).
    col = jax.lax.broadcasted_iota(jnp.int32, logits.shape, 1)
    valid = col < n_classes
    masked = jnp.where(valid, logits, jnp.float32(-1e30))
    m = jnp.max(masked, axis=-1, keepdims=True)
    shifted = masked - m
    lse = jnp.log(jnp.sum(jnp.exp(shifted), axis=-1, keepdims=True))
    o_ref[...] = jnp.where(valid, shifted - lse, 0.0).astype(o_ref.dtype)


@functools.partial(jax.jit, static_argnames=("block_b", "out_dtype"))
def mlp_forward(x, w1, b1, w2, b2, w3, b3, w4, b4, *, block_b=1024,
                out_dtype=jnp.bfloat16):
    B, f_in = x.shape
    n_hidden = w1.shape[1]
    n_out = w4.shape[1]
    h_pad = _round_up(n_hidden, LANE)   # 64 -> 128
    o_pad = _round_up(n_out, LANE)      # 10 -> 128

    def pad_w(w, rows, cols):
        return (jnp.zeros((rows, cols), jnp.bfloat16)
                .at[: w.shape[0], : w.shape[1]].set(w.astype(jnp.bfloat16)))

    def pad_b(b, cols):
        return (jnp.zeros((1, cols), jnp.float32)
                .at[:, : b.shape[1]].set(b.astype(jnp.float32)))

    # Weights are tiny (<0.3 MiB total): pad widths to 128 lanes with zero
    # rows/cols and cast to bf16. They stay VMEM-resident across grid steps
    # (constant index_map), so the padding adds no per-row HBM cost and keeps
    # every tile lane-dense. Zero rows/cols contribute exactly 0 -> bit-exact.
    w1p = pad_w(w1, f_in, h_pad)
    w2p = pad_w(w2, h_pad, h_pad)
    w3p = pad_w(w3, h_pad, h_pad)
    w4p = pad_w(w4, h_pad, o_pad)
    b1p = pad_b(b1, h_pad)
    b2p = pad_b(b2, h_pad)
    b3p = pad_b(b3, h_pad)
    b4p = pad_b(b4, o_pad)

    # Batch tile: 16-aligned (bf16 sublane packing), capped by block_b, and
    # small enough to give >= 2 grid steps when B allows (both TCs on v7x).
    tb = min(block_b, _round_up(B, 16))
    if B > 16 and pl.cdiv(B, tb) < 2:
        tb = _round_up(pl.cdiv(B, 2), 16)
    grid = (pl.cdiv(B, tb),)

    const2d = lambda shape: pl.BlockSpec(shape, lambda i: (0, 0))
    in_specs = [
        pl.BlockSpec((tb, f_in), lambda i: (i, 0)),   # x tile (cast in-kernel)
        const2d(w1p.shape), const2d(b1p.shape),
        const2d(w2p.shape), const2d(b2p.shape),
        const2d(w3p.shape), const2d(b3p.shape),
        const2d(w4p.shape), const2d(b4p.shape),
    ]
    out_specs = pl.BlockSpec((tb, o_pad), lambda i: (i, 0))

    weight_bytes = sum(int(a.size) * a.dtype.itemsize
                       for a in (w1p, b1p, w2p, b2p, w3p, b3p, w4p, b4p))
    out_itemsize = jnp.dtype(out_dtype).itemsize
    cost = pl.CostEstimate(
        flops=2 * B * (f_in * h_pad + 2 * h_pad * h_pad + h_pad * o_pad),
        transcendentals=B * (o_pad + 1),
        bytes_accessed=(B * f_in * x.dtype.itemsize + weight_bytes
                        + B * o_pad * out_itemsize),
    )

    out_padded = pl.pallas_call(
        functools.partial(mlp_kernel, n_classes=n_out),
        out_shape=jax.ShapeDtypeStruct((B, o_pad), out_dtype),
        grid=grid,
        in_specs=in_specs,
        out_specs=out_specs,
        compiler_params=pltpu.CompilerParams(
            dimension_semantics=("parallel",),
            # Safe common ceiling across v5e/v6e/v7x (v7x scoped VMEM is
            # smaller); footprint at tb=1024 is ~8 MiB (x f32 double-buffered).
            vmem_limit_bytes=32 * 1024 * 1024,
        ),
        cost_estimate=cost,
    )(x, w1p, b1p, w2p, b2p, w3p, b3p, w4p, b4p)

    # Column slice only — no batch padding was added, so no row slice / extra
    # output rows ever hit HBM. Returned log-probs are bf16 by default.
    return out_padded[:, :n_out]


def _init_linear(key, fan_in, fan_out):
    """PyTorch nn.Linear-style init: U(-1/sqrt(fan_in), 1/sqrt(fan_in)).
    Weight returned as (fan_in, fan_out) so the kernel does x @ W."""
    kw, kb = jax.random.split(key)
    bound = 1.0 / (fan_in ** 0.5)
    w = jax.random.uniform(kw, (fan_in, fan_out), jnp.float32, -bound, bound)
    b = jax.random.uniform(kb, (1, fan_out), jnp.float32, -bound, bound)
    return w, b


if __name__ == "__main__":
    key = jax.random.PRNGKey(0)
    k_x, k1, k2, k3, k4 = jax.random.split(key, 5)

    w1, b1 = _init_linear(k1, 28 * 28, 64)
    w2, b2 = _init_linear(k2, 64, 64)
    w3, b3 = _init_linear(k3, 64, 64)
    w4, b4 = _init_linear(k4, 64, 10)

    # Reference with the same bf16-matmul / f32-accumulate recipe (f32 output).
    def ref(xx):
        def lin(h, w, b):
            return jnp.dot(h.astype(jnp.bfloat16), w.astype(jnp.bfloat16),
                           preferred_element_type=jnp.float32) + b
        h = jnp.maximum(lin(xx, w1, b1), 0.0)
        h = jnp.maximum(lin(h, w2, b2), 0.0)
        h = jnp.maximum(lin(h, w3, b3), 0.0)
        return jax.nn.log_softmax(lin(h, w4, b4), axis=1)

    # --- main small example: batch = 8 ---
    x = jax.random.normal(k_x, (8, 28 * 28), jnp.float32)
    out = jax.block_until_ready(mlp_forward(x, w1, b1, w2, b2, w3, b3, w4, b4))
    assert out.shape == (8, 10), out.shape
    out_f32 = out.astype(jnp.float32)
    row_sums = jnp.sum(jnp.exp(out_f32), axis=1)
    assert jnp.allclose(row_sums, 1.0, atol=2e-2), row_sums
    # Tolerance covers the final bf16 rounding of the log-probs.
    assert jnp.allclose(out_f32, ref(x), atol=2e-2, rtol=2e-2), "mismatch vs ref"

    # --- ragged / multi-step path: batch = 37 -> tb = 32, grid = (2,) ---
    x2 = jax.random.normal(k_x, (37, 28 * 28), jnp.float32)
    out2 = jax.block_until_ready(mlp_forward(x2, w1, b1, w2, b2, w3, b3, w4, b4))
    assert out2.shape == (37, 10), out2.shape
    assert jnp.allclose(out2.astype(jnp.float32), ref(x2),
                        atol=2e-2, rtol=2e-2), "mismatch vs ref (ragged)"

    print("KERNEL_OK")
</pallas_src>

<mosaic_0001>
module attributes {stable_mosaic.version = 11 : i64} {
  func.func @mlp_kernel(%arg0: i32, %arg1: memref<16x784xf32, #tpu.memory_space<vmem>>, %arg2: memref<784x128xbf16, #tpu.memory_space<vmem>>, %arg3: memref<1x128xf32, #tpu.memory_space<vmem>>, %arg4: memref<128x128xbf16, #tpu.memory_space<vmem>>, %arg5: memref<1x128xf32, #tpu.memory_space<vmem>>, %arg6: memref<128x128xbf16, #tpu.memory_space<vmem>>, %arg7: memref<1x128xf32, #tpu.memory_space<vmem>>, %arg8: memref<128x128xbf16, #tpu.memory_space<vmem>>, %arg9: memref<1x128xf32, #tpu.memory_space<vmem>>, %arg10: memref<16x128xbf16, #tpu.memory_space<vmem>>) attributes {dimension_semantics = [#tpu.dimension_semantics<parallel>], iteration_bounds = array<i64: 1>, scalar_prefetch = 0 : i64, scratch_operands = 0 : i64, tpu.core_type = #tpu.core_type<tc>, window_params = [{transform_indices = @transform_0, window_bounds = array<i64: 16, 784>}, {pipeline_mode = #tpu.pipeline_mode<synchronous>, transform_indices = @transform_1, window_bounds = array<i64: 784, 128>}, {pipeline_mode = #tpu.pipeline_mode<synchronous>, transform_indices = @transform_2, window_bounds = array<i64: 1, 128>}, {pipeline_mode = #tpu.pipeline_mode<synchronous>, transform_indices = @transform_3, window_bounds = array<i64: 128, 128>}, {pipeline_mode = #tpu.pipeline_mode<synchronous>, transform_indices = @transform_4, window_bounds = array<i64: 1, 128>}, {pipeline_mode = #tpu.pipeline_mode<synchronous>, transform_indices = @transform_5, window_bounds = array<i64: 128, 128>}, {pipeline_mode = #tpu.pipeline_mode<synchronous>, transform_indices = @transform_6, window_bounds = array<i64: 1, 128>}, {pipeline_mode = #tpu.pipeline_mode<synchronous>, transform_indices = @transform_7, window_bounds = array<i64: 128, 128>}, {pipeline_mode = #tpu.pipeline_mode<synchronous>, transform_indices = @transform_8, window_bounds = array<i64: 1, 128>}, {transform_indices = @transform_9, window_bounds = array<i64: 16, 128>}]} {
    %c0 = arith.constant 0 : index
    %c0_0 = arith.constant 0 : index
    %0 = vector.load %arg1[%c0, %c0_0] : memref<16x784xf32, #tpu.memory_space<vmem>>, vector<16x784xf32>
    %1 = arith.truncf %0 : vector<16x784xf32> to vector<16x784xbf16>
    %c0_1 = arith.constant 0 : index
    %c0_2 = arith.constant 0 : index
    %2 = vector.load %arg2[%c0_1, %c0_2] : memref<784x128xbf16, #tpu.memory_space<vmem>>, vector<784x128xbf16>
    %cst = arith.constant dense<0.000000e+00> : vector<16x128xf32>
    %3 = tpu.matmul %1, %2, %cst {dimension_numbers = #tpu.dot_dimension_numbers<[1], [0], [0], [1], [0, 0, 1, 1], [], []>} : vector<16x784xbf16>, vector<784x128xbf16>, vector<16x128xf32> -> vector<16x128xf32>
    %c0_3 = arith.constant 0 : index
    %c0_4 = arith.constant 0 : index
    %4 = vector.load %arg3[%c0_3, %c0_4] : memref<1x128xf32, #tpu.memory_space<vmem>>, vector<1x128xf32>
    %5 = vector.broadcast %4 : vector<1x128xf32> to vector<16x128xf32>
    %6 = arith.addf %3, %5 : vector<16x128xf32>
    %cst_5 = arith.constant 0.000000e+00 : f32
    %7 = vector.broadcast %cst_5 : f32 to vector<16x128xf32>
    %8 = arith.maximumf %6, %7 : vector<16x128xf32>
    %9 = arith.truncf %8 : vector<16x128xf32> to vector<16x128xbf16>
    %c0_6 = arith.constant 0 : index
    %c0_7 = arith.constant 0 : index
    %10 = vector.load %arg4[%c0_6, %c0_7] : memref<128x128xbf16, #tpu.memory_space<vmem>>, vector<128x128xbf16>
    %cst_8 = arith.constant dense<0.000000e+00> : vector<16x128xf32>
    %11 = tpu.matmul %9, %10, %cst_8 {dimension_numbers = #tpu.dot_dimension_numbers<[1], [0], [0], [1], [0, 0, 1, 1], [], []>} : vector<16x128xbf16>, vector<128x128xbf16>, vector<16x128xf32> -> vector<16x128xf32>
    %c0_9 = arith.constant 0 : index
    %c0_10 = arith.constant 0 : index
    %12 = vector.load %arg5[%c0_9, %c0_10] : memref<1x128xf32, #tpu.memory_space<vmem>>, vector<1x128xf32>
    %13 = vector.broadcast %12 : vector<1x128xf32> to vector<16x128xf32>
    %14 = arith.addf %11, %13 : vector<16x128xf32>
    %cst_11 = arith.constant 0.000000e+00 : f32
    %15 = vector.broadcast %cst_11 : f32 to vector<16x128xf32>
    %16 = arith.maximumf %14, %15 : vector<16x128xf32>
    %17 = arith.truncf %16 : vector<16x128xf32> to vector<16x128xbf16>
    %c0_12 = arith.constant 0 : index
    %c0_13 = arith.constant 0 : index
    %18 = vector.load %arg6[%c0_12, %c0_13] : memref<128x128xbf16, #tpu.memory_space<vmem>>, vector<128x128xbf16>
    %cst_14 = arith.constant dense<0.000000e+00> : vector<16x128xf32>
    %19 = tpu.matmul %17, %18, %cst_14 {dimension_numbers = #tpu.dot_dimension_numbers<[1], [0], [0], [1], [0, 0, 1, 1], [], []>} : vector<16x128xbf16>, vector<128x128xbf16>, vector<16x128xf32> -> vector<16x128xf32>
    %c0_15 = arith.constant 0 : index
    %c0_16 = arith.constant 0 : index
    %20 = vector.load %arg7[%c0_15, %c0_16] : memref<1x128xf32, #tpu.memory_space<vmem>>, vector<1x128xf32>
    %21 = vector.broadcast %20 : vector<1x128xf32> to vector<16x128xf32>
    %22 = arith.addf %19, %21 : vector<16x128xf32>
    %cst_17 = arith.constant 0.000000e+00 : f32
    %23 = vector.broadcast %cst_17 : f32 to vector<16x128xf32>
    %24 = arith.maximumf %22, %23 : vector<16x128xf32>
    %25 = arith.truncf %24 : vector<16x128xf32> to vector<16x128xbf16>
    %c0_18 = arith.constant 0 : index
    %c0_19 = arith.constant 0 : index
    %26 = vector.load %arg8[%c0_18, %c0_19] : memref<128x128xbf16, #tpu.memory_space<vmem>>, vector<128x128xbf16>
    %cst_20 = arith.constant dense<0.000000e+00> : vector<16x128xf32>
    %27 = tpu.matmul %25, %26, %cst_20 {dimension_numbers = #tpu.dot_dimension_numbers<[1], [0], [0], [1], [0, 0, 1, 1], [], []>} : vector<16x128xbf16>, vector<128x128xbf16>, vector<16x128xf32> -> vector<16x128xf32>
    %c0_21 = arith.constant 0 : index
    %c0_22 = arith.constant 0 : index
    %28 = vector.load %arg9[%c0_21, %c0_22] : memref<1x128xf32, #tpu.memory_space<vmem>>, vector<1x128xf32>
    %29 = vector.broadcast %28 : vector<1x128xf32> to vector<16x128xf32>
    %30 = arith.addf %27, %29 : vector<16x128xf32>
    %31 = tpu.iota {dimensions = array<i32: 1>} : vector<16x128xi32>
    %c10_i32 = arith.constant 10 : i32
    %32 = vector.broadcast %c10_i32 : i32 to vector<16x128xi32>
    %33 = arith.cmpi slt, %31, %32 : vector<16x128xi32>
    %cst_23 = arith.constant -1.000000e+30 : f32
    %34 = vector.broadcast %cst_23 : f32 to vector<16x128xf32>
    %35 = arith.select %33, %30, %34 : vector<16x128xi1>, vector<16x128xf32>
    %cst_24 = arith.constant dense<0xFF800000> : vector<16xf32>
    %36 = vector.multi_reduction <maximumf>, %35, %cst_24 [1] : vector<16x128xf32> to vector<16xf32>
    %37 = vector.shape_cast %36 : vector<16xf32> to vector<16x1xf32>
    %38 = vector.broadcast %37 : vector<16x1xf32> to vector<16x128xf32>
    %39 = arith.subf %35, %38 : vector<16x128xf32>
    %40 = math.exp %39 : vector<16x128xf32>
    %cst_25 = arith.constant dense<0.000000e+00> : vector<16xf32>
    %41 = vector.multi_reduction <add>, %40, %cst_25 [1] : vector<16x128xf32> to vector<16xf32>
    %42 = vector.shape_cast %41 : vector<16xf32> to vector<16x1xf32>
    %43 = math.log %42 : vector<16x1xf32>
    %44 = vector.broadcast %43 : vector<16x1xf32> to vector<16x128xf32>
    %45 = arith.subf %39, %44 : vector<16x128xf32>
    %cst_26 = arith.constant 0.000000e+00 : f32
    %46 = vector.broadcast %cst_26 : f32 to vector<16x128xf32>
    %47 = arith.select %33, %45, %46 : vector<16x128xi1>, vector<16x128xf32>
    %48 = arith.truncf %47 : vector<16x128xf32> to vector<16x128xbf16>
    %c0_27 = arith.constant 0 : index
    %c0_28 = arith.constant 0 : index
    %49 = vector.load %arg10[%c0_27, %c0_28] : memref<16x128xbf16, #tpu.memory_space<vmem>>, vector<16x128xbf16>
    tpu.vector_store %arg10[%c0_27, %c0_28], %48 {strides = array<i32>} : memref<16x128xbf16, #tpu.memory_space<vmem>>, vector<16x128xbf16>,
    return
  }
  func.func @transform_0(%arg0: i32) -> (i32, i32) {
    %c0_i32 = arith.constant 0 : i32
    %c0_i32_0 = arith.constant 0 : i32
    return %arg0, %c0_i32 : i32, i32
  }
  func.func @transform_1(%arg0: i32) -> (i32, i32) {
    %c0_i32 = arith.constant 0 : i32
    %c0_i32_0 = arith.constant 0 : i32
    %c0_i32_1 = arith.constant 0 : i32
    return %c0_i32, %c0_i32_0 : i32, i32
  }
  func.func @transform_2(%arg0: i32) -> (i32, i32) {
    %c0_i32 = arith.constant 0 : i32
    %c0_i32_0 = arith.constant 0 : i32
    %c0_i32_1 = arith.constant 0 : i32
    return %c0_i32, %c0_i32_0 : i32, i32
  }
  func.func @transform_3(%arg0: i32) -> (i32, i32) {
    %c0_i32 = arith.constant 0 : i32
    %c0_i32_0 = arith.constant 0 : i32
    %c0_i32_1 = arith.constant 0 : i32
    return %c0_i32, %c0_i32_0 : i32, i32
  }
  func.func @transform_4(%arg0: i32) -> (i32, i32) {
    %c0_i32 = arith.constant 0 : i32
    %c0_i32_0 = arith.constant 0 : i32
    %c0_i32_1 = arith.constant 0 : i32
    return %c0_i32, %c0_i32_0 : i32, i32
  }
  func.func @transform_5(%arg0: i32) -> (i32, i32) {
    %c0_i32 = arith.constant 0 : i32
    %c0_i32_0 = arith.constant 0 : i32
    %c0_i32_1 = arith.constant 0 : i32
    return %c0_i32, %c0_i32_0 : i32, i32
  }
  func.func @transform_6(%arg0: i32) -> (i32, i32) {
    %c0_i32 = arith.constant 0 : i32
    %c0_i32_0 = arith.constant 0 : i32
    %c0_i32_1 = arith.constant 0 : i32
    return %c0_i32, %c0_i32_0 : i32, i32
  }
  func.func @transform_7(%arg0: i32) -> (i32, i32) {
    %c0_i32 = arith.constant 0 : i32
    %c0_i32_0 = arith.constant 0 : i32
    %c0_i32_1 = arith.constant 0 : i32
    return %c0_i32, %c0_i32_0 : i32, i32
  }
  func.func @transform_8(%arg0: i32) -> (i32, i32) {
    %c0_i32 = arith.constant 0 : i32
    %c0_i32_0 = arith.constant 0 : i32
    %c0_i32_1 = arith.constant 0 : i32
    return %c0_i32, %c0_i32_0 : i32, i32
  }
  func.func @transform_9(%arg0: i32) -> (i32, i32) {
    %c0_i32 = arith.constant 0 : i32
    %c0_i32_0 = arith.constant 0 : i32
    return %arg0, %c0_i32 : i32, i32
  }
}

</mosaic_0001>

<llo_original>
// kernel: mlp_forward.1
$region0: #{mlp_forward.1}
  #allocation0 [shape = 'u32[]', space=smem, size = 0x4, offset = 0x4, fixed_abs, tag = 'smem constant byte address 0x4 - core index']
  #allocation1 [shape = 'u32[144,128]{1,0:T(1,128)}', space=vmem, size = 0x12000, scoped, tag = 'internal scratch']
  %s0 = inlined_call_operand.vmem [shape: f32[8,784], index: 0, kind: input, shape index: {}]
  %s1 = inlined_call_operand.vmem [shape: bf16[784,128], index: 1, kind: input, shape index: {}]
  %s2 = inlined_call_operand.vmem [shape: f32[1,128], index: 2, kind: input, shape index: {}]
  %s3 = inlined_call_operand.vmem [shape: bf16[128,128], index: 3, kind: input, shape index: {}]
  %s4 = inlined_call_operand.vmem [shape: f32[1,128], index: 4, kind: input, shape index: {}]
  %s5 = inlined_call_operand.vmem [shape: bf16[128,128], index: 5, kind: input, shape index: {}]
  %s6 = inlined_call_operand.vmem [shape: f32[1,128], index: 6, kind: input, shape index: {}]
  %s7 = inlined_call_operand.vmem [shape: bf16[128,128], index: 7, kind: input, shape index: {}]
  %s8 = inlined_call_operand.vmem [shape: f32[1,128], index: 8, kind: input, shape index: {}]
  %s9 = inlined_call_operand.hbm [shape: bf16[8,128], index: 9, kind: output, shape index: {}]
  %s10 = sld [smem:[#allocation0]]
  $region46: #{mlp_forward.1} parent=0
    _
  %s12 = ssub.s32 1, %s10
  %s13 = scalar_select 0, %s12, %s10
  $region1: #{mlp_forward.1} parent=0
    #allocation2 [shape = 'u8[4096]{0}', space=vmem, size = 0x1000, scoped, tag = 'output window, operand 0, single buffered']
    #allocation3 [shape = 's32[1]{0}', space=sflag, size = 0x4, scoped, tag = 'scoped memory for mlp_forward.1']
    %14 = vsyncpa [#allocation3], 0
    // Predicated region
    $region2: #{mlp_forward.1} parent=1 // pred_check
      _
    $region3: #{mlp_forward.1} parent=1 // pred_check_branch
      %16 = sbr.rel (0) target = $region5
    $region4: #{mlp_forward.1} parent=1 // pred_region
      _
    $region5: #{mlp_forward.1} parent=1 // pred_fallthru
      _
    // Predicated region
    $region6: #{mlp_forward.1} parent=1 // pred_check
      _
    $region7: #{mlp_forward.1} parent=1 // pred_check_branch
      %18 = sbr.rel (0) target = $region9
    $region8: #{mlp_forward.1} parent=1 // pred_region
      _
    $region9: #{mlp_forward.1} parent=1 // pred_fallthru
      _
    // Predicated region
    $region10: #{mlp_forward.1} parent=1 // pred_check
      _
    $region11: #{mlp_forward.1} parent=1 // pred_check_branch
      %20 = sbr.rel (0) target = $region13
    $region12: #{mlp_forward.1} parent=1 // pred_region
      _
    $region13: #{mlp_forward.1} parent=1 // pred_fallthru
      _
    // Predicated region
    $region14: #{mlp_forward.1} parent=1 // pred_check
      _
    $region15: #{mlp_forward.1} parent=1 // pred_check_branch
      %22 = sbr.rel (0) target = $region17
    $region16: #{mlp_forward.1} parent=1 // pred_region
      _
    $region17: #{mlp_forward.1} parent=1 // pred_fallthru
      _
    // Predicated region
    $region18: #{mlp_forward.1} parent=1 // pred_check
      _
    $region19: #{mlp_forward.1} parent=1 // pred_check_branch
      %24 = sbr.rel (0) target = $region21
    $region20: #{mlp_forward.1} parent=1 // pred_region
      _
    $region21: #{mlp_forward.1} parent=1 // pred_fallthru
      _
    // Predicated region
    $region22: #{mlp_forward.1} parent=1 // pred_check
      _
    $region23: #{mlp_forward.1} parent=1 // pred_check_branch
      %26 = sbr.rel (0) target = $region25
    $region24: #{mlp_forward.1} parent=1 // pred_region
      _
    $region25: #{mlp_forward.1} parent=1 // pred_fallthru
      _
    // Predicated region
    $region26: #{mlp_forward.1} parent=1 // pred_check
      _
    $region27: #{mlp_forward.1} parent=1 // pred_check_branch
      %28 = sbr.rel (0) target = $region29
    $region28: #{mlp_forward.1} parent=1 // pred_region
      _
    $region29: #{mlp_forward.1} parent=1 // pred_fallthru
      _
    // Predicated region
    $region30: #{mlp_forward.1} parent=1 // pred_check
      _
    $region31: #{mlp_forward.1} parent=1 // pred_check_branch
      %30 = sbr.rel (0) target = $region33
    $region32: #{mlp_forward.1} parent=1 // pred_region
      _
    $region33: #{mlp_forward.1} parent=1 // pred_fallthru
      _
    // Predicated region
    $region34: #{mlp_forward.1} parent=1 // pred_check
      _
    $region35: #{mlp_forward.1} parent=1 // pred_check_branch
      %32 = sbr.rel (0) target = $region37
    $region36: #{mlp_forward.1} parent=1 // pred_region
      _
    $region37: #{mlp_forward.1} parent=1 // pred_fallthru
      _
    %v34 = vld [vmem:[%s0] sm:$0xff]
    %v35 = vld [vmem:[%s0 + $0x8] sm:$0xff]
    %v36 = vld [vmem:[%s0 + $0x10] sm:$0xff]
    %v37 = vld [vmem:[%s0 + $0x18] sm:$0xff]
    %v38 = vld [vmem:[%s0 + $0x20] sm:$0xff]
    %v39 = vld [vmem:[%s0 + $0x28] sm:$0xff]
    %v40 = vld [vmem:[%s0 + $0x30] sm:$0xff]
    %v41 = vld [vmem:[%s0 + $0x38] sm:$0xff]
    %v42 = vld [vmem:[%s0 + $0x40] sm:$0xff]
    %v43 = vld [vmem:[%s0 + $0x48] sm:$0xff]
    %v44 = vld [vmem:[%s0 + $0x50] sm:$0xff]
    %v45 = vld [vmem:[%s0 + $0x58] sm:$0xff]
    %v46 = vld [vmem:[%s0 + $0x60] sm:$0xff]
    %v47 = vld [vmem:[%s0 + $0x68] sm:$0xff]
    %v48 = vpack.c.bf16 %v41, %v34
    %v49 = vpack.c.bf16 %v42, %v35
    %v50 = vpack.c.bf16 %v43, %v36
    %v51 = vpack.c.bf16 %v44, %v37
    %v52 = vpack.c.bf16 %v45, %v38
    %v53 = vpack.c.bf16 %v46, %v39
    %v54 = vpack.c.bf16 %v47, %v40
    %v55 = vld [vmem:[%s1] sm:$0xf]
    %v56 = vld [vmem:[%s1 + $0x4] sm:$0xf]
    %v57 = vld [vmem:[%s1 + $0x8] sm:$0xf]
    %v58 = vld [vmem:[%s1 + $0xc] sm:$0xf]
    %v59 = vld [vmem:[%s1 + $0x10] sm:$0xf]
    %v60 = vld [vmem:[%s1 + $0x14] sm:$0xf]
    %v61 = vld [vmem:[%s1 + $0x18] sm:$0xf]
    %v62 = vld [vmem:[%s1 + $0x1c] sm:$0xf]
    %v63 = vld [vmem:[%s1 + $0x20] sm:$0xf]
    %v64 = vld [vmem:[%s1 + $0x24] sm:$0xf]
    %v65 = vld [vmem:[%s1 + $0x28] sm:$0xf]
    %v66 = vld [vmem:[%s1 + $0x2c] sm:$0xf]
    %v67 = vld [vmem:[%s1 + $0x30] sm:$0xf]
    %v68 = vld [vmem:[%s1 + $0x34] sm:$0xf]
    %v69 = vld [vmem:[%s1 + $0x38] sm:$0xf]
    %v70 = vld [vmem:[%s1 + $0x3c] sm:$0xf]
    %v71 = vld [vmem:[%s1 + $0x40] sm:$0xf]
    %v72 = vld [vmem:[%s1 + $0x44] sm:$0xf]
    %v73 = vld [vmem:[%s1 + $0x48] sm:$0xf]
    %v74 = vld [vmem:[%s1 + $0x4c] sm:$0xf]
    %v75 = vld [vmem:[%s1 + $0x50] sm:$0xf]
    %v76 = vld [vmem:[%s1 + $0x54] sm:$0xf]
    %v77 = vld [vmem:[%s1 + $0x58] sm:$0xf]
    %v78 = vld [vmem:[%s1 + $0x5c] sm:$0xf]
    %v79 = vld [vmem:[%s1 + $0x60] sm:$0xf]
    %v80 = vld [vmem:[%s1 + $0x64] sm:$0xf]
    %v81 = vld [vmem:[%s1 + $0x68] sm:$0xf]
    %v82 = vld [vmem:[%s1 + $0x6c] sm:$0xf]
    %v83 = vld [vmem:[%s1 + $0x70] sm:$0xf]
    %v84 = vld [vmem:[%s1 + $0x74] sm:$0xf]
    %v85 = vld [vmem:[%s1 + $0x78] sm:$0xf]
    %v86 = vld [vmem:[%s1 + $0x7c] sm:$0xf]
    %v87 = vld [vmem:[%s1 + $0x80] sm:$0xf]
    %v88 = vld [vmem:[%s1 + $0x84] sm:$0xf]
    %v89 = vld [vmem:[%s1 + $0x88] sm:$0xf]
    %v90 = vld [vmem:[%s1 + $0x8c] sm:$0xf]
    %v91 = vld [vmem:[%s1 + $0x90] sm:$0xf]
    %v92 = vld [vmem:[%s1 + $0x94] sm:$0xf]
    %v93 = vld [vmem:[%s1 + $0x98] sm:$0xf]
    %v94 = vld [vmem:[%s1 + $0x9c] sm:$0xf]
    %v95 = vld [vmem:[%s1 + $0xa0] sm:$0xf]
    %v96 = vld [vmem:[%s1 + $0xa4] sm:$0xf]
    %v97 = vld [vmem:[%s1 + $0xa8] sm:$0xf]
    %v98 = vld [vmem:[%s1 + $0xac] sm:$0xf]
    %v99 = vld [vmem:[%s1 + $0xb0] sm:$0xf]
    %v100 = vld [vmem:[%s1 + $0xb4] sm:$0xf]
    %v101 = vld [vmem:[%s1 + $0xb8] sm:$0xf]
    %v102 = vld [vmem:[%s1 + $0xbc] sm:$0xf]
    %v103 = vld [vmem:[%s1 + $0xc0] sm:$0xf]
    %v104 = vld [vmem:[%s1 + $0xc4] sm:$0xf]
    %v105 = vld [vmem:[%s1 + $0xc8] sm:$0xf]
    %v106 = vld [vmem:[%s1 + $0xcc] sm:$0xf]
    %v107 = vld [vmem:[%s1 + $0xd0] sm:$0xf]
    %v108 = vld [vmem:[%s1 + $0xd4] sm:$0xf]
    %v109 = vld [vmem:[%s1 + $0xd8] sm:$0xf]
    %v110 = vld [vmem:[%s1 + $0xdc] sm:$0xf]
    %v111 = vld [vmem:[%s1 + $0xe0] sm:$0xf]
    %v112 = vld [vmem:[%s1 + $0xe4] sm:$0xf]
    %v113 = vld [vmem:[%s1 + $0xe8] sm:$0xf]
    %v114 = vld [vmem:[%s1 + $0xec] sm:$0xf]
    %v115 = vld [vmem:[%s1 + $0xf0] sm:$0xf]
    %v116 = vld [vmem:[%s1 + $0xf4] sm:$0xf]
    %v117 = vld [vmem:[%s1 + $0xf8] sm:$0xf]
    %v118 = vld [vmem:[%s1 + $0xfc] sm:$0xf]
    %v119 = vld [vmem:[%s1 + $0x100] sm:$0xf]
    %v120 = vld [vmem:[%s1 + $0x104] sm:$0xf]
    %v121 = vld [vmem:[%s1 + $0x108] sm:$0xf]
    %v122 = vld [vmem:[%s1 + $0x10c] sm:$0xf]
    %v123 = vld [vmem:[%s1 + $0x110] sm:$0xf]
    %v124 = vld [vmem:[%s1 + $0x114] sm:$0xf]
    %v125 = vld [vmem:[%s1 + $0x118] sm:$0xf]
    %v126 = vld [vmem:[%s1 + $0x11c] sm:$0xf]
    %v127 = vld [vmem:[%s1 + $0x120] sm:$0xf]
    %v128 = vld [vmem:[%s1 + $0x124] sm:$0xf]
    %v129 = vld [vmem:[%s1 + $0x128] sm:$0xf]
    %v130 = vld [vmem:[%s1 + $0x12c] sm:$0xf]
    %v131 = vld [vmem:[%s1 + $0x130] sm:$0xf]
    %v132 = vld [vmem:[%s1 + $0x134] sm:$0xf]
    %v133 = vld [vmem:[%s1 + $0x138] sm:$0xf]
    %v134 = vld [vmem:[%s1 + $0x13c] sm:$0xf]
    %v135 = vld [vmem:[%s1 + $0x140] sm:$0xf]
    %v136 = vld [vmem:[%s1 + $0x144] sm:$0xf]
    %v137 = vld [vmem:[%s1 + $0x148] sm:$0xf]
    %v138 = vld [vmem:[%s1 + $0x14c] sm:$0xf]
    %v139 = vld [vmem:[%s1 + $0x150] sm:$0xf]
    %v140 = vld [vmem:[%s1 + $0x154] sm:$0xf]
    %v141 = vld [vmem:[%s1 + $0x158] sm:$0xf]
    %v142 = vld [vmem:[%s1 + $0x15c] sm:$0xf]
    %v143 = vld [vmem:[%s1 + $0x160] sm:$0xf]
    %v144 = vld [vmem:[%s1 + $0x164] sm:$0xf]
    %v145 = vld [vmem:[%s1 + $0x168] sm:$0xf]
    %v146 = vld [vmem:[%s1 + $0x16c] sm:$0xf]
    %v147 = vld [vmem:[%s1 + $0x170] sm:$0xf]
    %v148 = vld [vmem:[%s1 + $0x174] sm:$0xf]
    %v149 = vld [vmem:[%s1 + $0x178] sm:$0xf]
    %v150 = vld [vmem:[%s1 + $0x17c] sm:$0xf]
    %v151 = vld [vmem:[%s1 + $0x180] sm:$0xf]
    %v152 = vld [vmem:[%s1 + $0x184] sm:$0xf]
    %v153 = vld [vmem:[%s2] sm:$0x1]
    %v155 = vlaneseq
    %v156 = vshrl.u32 %v155, 7
    %v157 = vsub.s32 0, %v156
    %v158 = vrot.slane %v153, %v157
    %v258 = vunpack.c.l.b16 %v55
    %v259 = vunpack.c.l.b16 %v56
    %v260 = vunpack.c.l.b16 %v57
    %v261 = vunpack.c.l.b16 %v58
    %v262 = vunpack.c.l.b16 %v59
    %v263 = vunpack.c.l.b16 %v60
    %v264 = vunpack.c.l.b16 %v61
    %v265 = vunpack.c.l.b16 %v62
    %v266 = vunpack.c.l.b16 %v63
    %v267 = vunpack.c.l.b16 %v64
    %v268 = vunpack.c.l.b16 %v65
    %v269 = vunpack.c.l.b16 %v66
    %v270 = vunpack.c.l.b16 %v67
    %v271 = vunpack.c.l.b16 %v68
    %v272 = vunpack.c.l.b16 %v69
    %v273 = vunpack.c.l.b16 %v70
    %v274 = vunpack.c.l.b16 %v71
    %v275 = vunpack.c.l.b16 %v72
    %v276 = vunpack.c.l.b16 %v73
    %v277 = vunpack.c.l.b16 %v74
    %v278 = vunpack.c.l.b16 %v75
    %v279 = vunpack.c.l.b16 %v76
    %v280 = vunpack.c.l.b16 %v77
    %v281 = vunpack.c.l.b16 %v78
    %v282 = vunpack.c.l.b16 %v79
    %v283 = vunpack.c.l.b16 %v80
    %v284 = vunpack.c.l.b16 %v81
    %v285 = vunpack.c.l.b16 %v82
    %v286 = vunpack.c.l.b16 %v83
    %v287 = vunpack.c.l.b16 %v84
    %v288 = vunpack.c.l.b16 %v85
    %v289 = vunpack.c.l.b16 %v86
    %v290 = vunpack.c.l.b16 %v87
    %v291 = vunpack.c.l.b16 %v88
    %v292 = vunpack.c.l.b16 %v89
    %v293 = vunpack.c.l.b16 %v90
    %v294 = vunpack.c.l.b16 %v91
    %v295 = vunpack.c.l.b16 %v92
    %v296 = vunpack.c.l.b16 %v93
    %v297 = vunpack.c.l.b16 %v94
    %v298 = vunpack.c.l.b16 %v95
    %v299 = vunpack.c.l.b16 %v96
    %v300 = vunpack.c.l.b16 %v97
    %v301 = vunpack.c.l.b16 %v98
    %v302 = vunpack.c.l.b16 %v99
    %v303 = vunpack.c.l.b16 %v100
    %v304 = vunpack.c.l.b16 %v101
    %v305 = vunpack.c.l.b16 %v102
    %v306 = vunpack.c.l.b16 %v103
    %v307 = vunpack.c.l.b16 %v104
    %v308 = vunpack.c.l.b16 %v105
    %v309 = vunpack.c.l.b16 %v106
    %v310 = vunpack.c.l.b16 %v107
    %v311 = vunpack.c.l.b16 %v108
    %v312 = vunpack.c.l.b16 %v109
    %v313 = vunpack.c.l.b16 %v110
    %v314 = vunpack.c.l.b16 %v111
    %v315 = vunpack.c.l.b16 %v112
    %v316 = vunpack.c.l.b16 %v113
    %v317 = vunpack.c.l.b16 %v114
    %v318 = vunpack.c.l.b16 %v115
    %v319 = vunpack.c.l.b16 %v116
    %v320 = vunpack.c.l.b16 %v117
    %v321 = vunpack.c.l.b16 %v118
    %v322 = vunpack.c.l.b16 %v119
    %v323 = vunpack.c.l.b16 %v120
    %v324 = vunpack.c.l.b16 %v121
    %v325 = vunpack.c.l.b16 %v122
    %v326 = vunpack.c.l.b16 %v123
    %v327 = vunpack.c.l.b16 %v124
    %v328 = vunpack.c.l.b16 %v125
    %v329 = vunpack.c.l.b16 %v126
    %v330 = vunpack.c.l.b16 %v127
    %v331 = vunpack.c.l.b16 %v128
    %v332 = vunpack.c.l.b16 %v129
    %v333 = vunpack.c.l.b16 %v130
    %v334 = vunpack.c.l.b16 %v131
    %v335 = vunpack.c.l.b16 %v132
    %v336 = vunpack.c.l.b16 %v133
    %v337 = vunpack.c.l.b16 %v134
    %v338 = vunpack.c.l.b16 %v135
    %v339 = vunpack.c.l.b16 %v136
    %v340 = vunpack.c.l.b16 %v137
    %v341 = vunpack.c.l.b16 %v138
    %v342 = vunpack.c.l.b16 %v139
    %v343 = vunpack.c.l.b16 %v140
    %v344 = vunpack.c.l.b16 %v141
    %v345 = vunpack.c.l.b16 %v142
    %v346 = vunpack.c.l.b16 %v143
    %v347 = vunpack.c.l.b16 %v144
    %v348 = vunpack.c.l.b16 %v145
    %v349 = vunpack.c.l.b16 %v146
    %v350 = vunpack.c.l.b16 %v147
    %v351 = vunpack.c.l.b16 %v148
    %v352 = vunpack.c.l.b16 %v149
    %v353 = vunpack.c.l.b16 %v150
    %v354 = vunpack.c.l.b16 %v151
    %v355 = vunpack.c.l.b16 %v152
    %v356 = vpack.c.b16 %v259, %v258
    %v357 = vpack.c.b16 %v261, %v260
    %v358 = vpack.c.b16 %v263, %v262
    %v359 = vpack.c.b16 %v265, %v264
    %v360 = vpack.c.b16 %v267, %v266
    %v361 = vpack.c.b16 %v269, %v268
    %v362 = vpack.c.b16 %v271, %v270
    %v363 = vpack.c.b16 %v273, %v272
    %v364 = vpack.c.b16 %v275, %v274
    %v365 = vpack.c.b16 %v277, %v276
    %v366 = vpack.c.b16 %v279, %v278
    %v367 = vpack.c.b16 %v281, %v280
    %v368 = vpack.c.b16 %v283, %v282
    %v369 = vpack.c.b16 %v285, %v284
    %v370 = vpack.c.b16 %v287, %v286
    %v371 = vpack.c.b16 %v289, %v288
    %v372 = vpack.c.b16 %v291, %v290
    %v373 = vpack.c.b16 %v293, %v292
    %v374 = vpack.c.b16 %v295, %v294
    %v375 = vpack.c.b16 %v297, %v296
    %v376 = vpack.c.b16 %v299, %v298
    %v377 = vpack.c.b16 %v301, %v300
    %v378 = vpack.c.b16 %v303, %v302
    %v379 = vpack.c.b16 %v305, %v304
    %v380 = vpack.c.b16 %v307, %v306
    %v381 = vpack.c.b16 %v309, %v308
    %v382 = vpack.c.b16 %v311, %v310
    %v383 = vpack.c.b16 %v313, %v312
    %v384 = vpack.c.b16 %v315, %v314
    %v385 = vpack.c.b16 %v317, %v316
    %v386 = vpack.c.b16 %v319, %v318
    %v387 = vpack.c.b16 %v321, %v320
    %v388 = vpack.c.b16 %v323, %v322
    %v389 = vpack.c.b16 %v325, %v324
    %v390 = vpack.c.b16 %v327, %v326
    %v391 = vpack.c.b16 %v329, %v328
    %v392 = vpack.c.b16 %v331, %v330
    %v393 = vpack.c.b16 %v333, %v332
    %v394 = vpack.c.b16 %v335, %v334
    %v395 = vpack.c.b16 %v337, %v336
    %v396 = vpack.c.b16 %v339, %v338
    %v397 = vpack.c.b16 %v341, %v340
    %v398 = vpack.c.b16 %v343, %v342
    %v399 = vpack.c.b16 %v345, %v344
    %v400 = vpack.c.b16 %v347, %v346
    %v401 = vpack.c.b16 %v349, %v348
    %v402 = vpack.c.b16 %v351, %v350
    %v403 = vpack.c.b16 %v353, %v352
    %v404 = vpack.c.b16 %v355, %v354
    %vm454 = vcmask 130048
    %v456 = vsel %vm454, %v54, 0
    %458 = vmatprep.subr.bf16.mxu0 0
    %459 = vmatpush1.bf16.msra.mxu0 %v356
    %460 = vmatprep.subr.bf16.mxu0 0
    %461 = vmatpush1.bf16.msra.mxu0 %v357
    %462 = vmatprep.subr.bf16.mxu0 0
    %463 = vmatpush1.bf16.msra.mxu0 %v358
    %464 = vmatprep.subr.bf16.mxu0 0
    %465 = vmatpush1.bf16.msra.mxu0 %v359
    %466 = vmatprep.subr.bf16.mxu0 0
    %467 = vmatpush1.bf16.msra.mxu0 %v360
    %468 = vmatprep.subr.bf16.mxu0 0
    %469 = vmatpush1.bf16.msra.mxu0 %v361
    %470 = vmatprep.subr.bf16.mxu0 0
    %471 = vmatpush1.bf16.msra.mxu0 %v362
    %472 = vmatprep.subr.bf16.mxu0 0
    %473 = vmatpush1.bf16.msra.mxu0 %v363
    %474 = vmatprep.subr.bf16.mxu0 0
    %475 = vmatpush1.bf16.msra.mxu0 %v364
    %476 = vmatprep.subr.bf16.mxu0 0
    %477 = vmatpush1.bf16.msra.mxu0 %v365
    %478 = vmatprep.subr.bf16.mxu0 0
    %479 = vmatpush1.bf16.msra.mxu0 %v366
    %480 = vmatprep.subr.bf16.mxu0 0
    %481 = vmatpush1.bf16.msra.mxu0 %v367
    %482 = vmatprep.subr.bf16.mxu0 0
    %483 = vmatpush1.bf16.msra.mxu0 %v368
    %484 = vmatprep.subr.bf16.mxu0 0
    %485 = vmatpush1.bf16.msra.mxu0 %v369
    %486 = vmatprep.subr.bf16.mxu0 0
    %487 = vmatpush1.bf16.msra.mxu0 %v370
    %488 = vmatprep.subr.bf16.mxu0 0
    %489 = vmatpush1.bf16.msra.mxu0 %v371
    %490 = vmatprep.mubr.bf16.mxu0 %v49
    %491 = vmatmul.mubr.bf16.gmra.mrb[0].mxu0 %v48
    %v492 = vpop.f32.mrb[0].mxu0
    %v493 = vadd.f32 %v158, %v492
    %v494 = vpop.f32.mrb[0].mxu0
    %v495 = vpop.f32.mrb[0].mxu0
    %v496 = vadd.f32 %v158, %v495
    %v497 = vpop.f32.mrb[0].mxu0
    %498 = vdwg.mxu0
    %499 = vmatprep.subr.bf16.mxu0 0
    %500 = vmatpush1.bf16.msra.mxu0 %v372
    %501 = vmatprep.subr.bf16.mxu0 0
    %502 = vmatpush1.bf16.msra.mxu0 %v373
    %503 = vmatprep.subr.bf16.mxu0 0
    %504 = vmatpush1.bf16.msra.mxu0 %v374
    %505 = vmatprep.subr.bf16.mxu0 0
    %506 = vmatpush1.bf16.msra.mxu0 %v375
    %507 = vmatprep.subr.bf16.mxu0 0
    %508 = vmatpush1.bf16.msra.mxu0 %v376
    %509 = vmatprep.subr.bf16.mxu0 0
    %510 = vmatpush1.bf16.msra.mxu0 %v377
    %511 = vmatprep.subr.bf16.mxu0 0
    %512 = vmatpush1.bf16.msra.mxu0 %v378
    %513 = vmatprep.subr.bf16.mxu0 0
    %514 = vmatpush1.bf16.msra.mxu0 %v379
    %515 = vmatprep.subr.bf16.mxu0 0
    %516 = vmatpush1.bf16.msra.mxu0 %v380
    %517 = vmatprep.subr.bf16.mxu0 0
    %518 = vmatpush1.bf16.msra.mxu0 %v381
    %519 = vmatprep.subr.bf16.mxu0 0
    %520 = vmatpush1.bf16.msra.mxu0 %v382
    %521 = vmatprep.subr.bf16.mxu0 0
    %522 = vmatpush1.bf16.msra.mxu0 %v383
    %523 = vmatprep.subr.bf16.mxu0 0
    %524 = vmatpush1.bf16.msra.mxu0 %v384
    %525 = vmatprep.subr.bf16.mxu0 0
    %526 = vmatpush1.bf16.msra.mxu0 %v385
    %527 = vmatprep.subr.bf16.mxu0 0
    %528 = vmatpush1.bf16.msra.mxu0 %v386
    %529 = vmatprep.subr.bf16.mxu0 0
    %530 = vmatpush1.bf16.msra.mxu0 %v387
    %531 = vmatprep.mubr.bf16.mxu0 %v51
    %532 = vmatmul.mubr.bf16.gmra.mrb[0].mxu0 %v50
    %v533 = vpop.f32.mrb[0].mxu0
    %v534 = vadd.f32 %v493, %v533
    %v535 = vpop.f32.mrb[0].mxu0
    %v536 = vpop.f32.mrb[0].mxu0
    %v537 = vadd.f32 %v496, %v536
    %v538 = vpop.f32.mrb[0].mxu0
    %539 = vdwg.mxu0
    %540 = vmatprep.subr.bf16.mxu0 0
    %541 = vmatpush1.bf16.msra.mxu0 %v388
    %542 = vmatprep.subr.bf16.mxu0 0
    %543 = vmatpush1.bf16.msra.mxu0 %v389
    %544 = vmatprep.subr.bf16.mxu0 0
    %545 = vmatpush1.bf16.msra.mxu0 %v390
    %546 = vmatprep.subr.bf16.mxu0 0
    %547 = vmatpush1.bf16.msra.mxu0 %v391
    %548 = vmatprep.subr.bf16.mxu0 0
    %549 = vmatpush1.bf16.msra.mxu0 %v392
    %550 = vmatprep.subr.bf16.mxu0 0
    %551 = vmatpush1.bf16.msra.mxu0 %v393
    %552 = vmatprep.subr.bf16.mxu0 0
    %553 = vmatpush1.bf16.msra.mxu0 %v394
    %554 = vmatprep.subr.bf16.mxu0 0
    %555 = vmatpush1.bf16.msra.mxu0 %v395
    %556 = vmatprep.subr.bf16.mxu0 0
    %557 = vmatpush1.bf16.msra.mxu0 %v396
    %558 = vmatprep.subr.bf16.mxu0 0
    %559 = vmatpush1.bf16.msra.mxu0 %v397
    %560 = vmatprep.subr.bf16.mxu0 0
    %561 = vmatpush1.bf16.msra.mxu0 %v398
    %562 = vmatprep.subr.bf16.mxu0 0
    %563 = vmatpush1.bf16.msra.mxu0 %v399
    %564 = vmatprep.subr.bf16.mxu0 0
    %565 = vmatpush1.bf16.msra.mxu0 %v400
    %566 = vmatprep.subr.bf16.mxu0 0
    %567 = vmatpush1.bf16.msra.mxu0 %v401
    %568 = vmatprep.subr.bf16.mxu0 0
    %569 = vmatpush1.bf16.msra.mxu0 %v402
    %570 = vmatprep.subr.bf16.mxu0 0
    %571 = vmatpush1.bf16.msra.mxu0 %v403
    %572 = vmatprep.mubr.bf16.mxu0 %v53
    %573 = vmatmul.mubr.bf16.gmra.mrb[0].mxu0 %v52
    %v574 = vpop.f32.mrb[0].mxu0
    %v575 = vadd.f32 %v534, %v574
    %v576 = vpop.f32.mrb[0].mxu0
    %v577 = vpop.f32.mrb[0].mxu0
    %v578 = vadd.f32 %v537, %v577
    %v579 = vpop.f32.mrb[0].mxu0
    %580 = vdwg.mxu0
    %581 = vmatprep.subr.bf16.mxu0 0
    %582 = vmatpush1.bf16.msra.mxu0 %v404
    %583 = vmatprep.subr.bf16.mxu0 0
    %584 = vmatpush1.bf16.msra.mxu0 0
    %585 = vmatprep.subr.bf16.mxu0 0
    %586 = vmatpush1.bf16.msra.mxu0 0
    %587 = vmatprep.subr.bf16.mxu0 0
    %588 = vmatpush1.bf16.msra.mxu0 0
    %589 = vmatprep.subr.bf16.mxu0 0
    %590 = vmatpush1.bf16.msra.mxu0 0
    %591 = vmatprep.subr.bf16.mxu0 0
    %592 = vmatpush1.bf16.msra.mxu0 0
    %593 = vmatprep.subr.bf16.mxu0 0
    %594 = vmatpush1.bf16.msra.mxu0 0
    %595 = vmatprep.subr.bf16.mxu0 0
    %596 = vmatpush1.bf16.msra.mxu0 0
    %597 = vmatprep.subr.bf16.mxu0 0
    %598 = vmatpush1.bf16.msra.mxu0 0
    %599 = vmatprep.subr.bf16.mxu0 0
    %600 = vmatpush1.bf16.msra.mxu0 0
    %601 = vmatprep.subr.bf16.mxu0 0
    %602 = vmatpush1.bf16.msra.mxu0 0
    %603 = vmatprep.subr.bf16.mxu0 0
    %604 = vmatpush1.bf16.msra.mxu0 0
    %605 = vmatprep.subr.bf16.mxu0 0
    %606 = vmatpush1.bf16.msra.mxu0 0
    %607 = vmatprep.subr.bf16.mxu0 0
    %608 = vmatpush1.bf16.msra.mxu0 0
    %609 = vmatprep.subr.bf16.mxu0 0
    %610 = vmatpush1.bf16.msra.mxu0 0
    %611 = vmatprep.subr.bf16.mxu0 0
    %612 = vmatpush1.bf16.msra.mxu0 0
    %613 = vmatprep.mubr.bf16.mxu0 0
    %614 = vmatmul.mubr.bf16.gmra.mrb[0].mxu0 %v456
    %v615 = vpop.f32.mrb[0].mxu0
    %v616 = vadd.f32 %v575, %v615
    %v617 = vpop.f32.mrb[0].mxu0
    %v618 = vpop.f32.mrb[0].mxu0
    %v619 = vadd.f32 %v578, %v618
    %v620 = vpop.f32.mrb[0].mxu0
    %621 = vdwg.mxu0
    %v622 = vmax.f32 %v616, 0.0
    %v623 = vmax.f32 %v619, 0.0
    %v624 = vpack.c.bf16 %v623, %v622
    %v625 = vld [vmem:[%s3] sm:$0xf]
    %v626 = vld [vmem:[%s3 + $0x4] sm:$0xf]
    %v627 = vld [vmem:[%s3 + $0x8] sm:$0xf]
    %v628 = vld [vmem:[%s3 + $0xc] sm:$0xf]
    %v629 = vld [vmem:[%s3 + $0x10] sm:$0xf]
    %v630 = vld [vmem:[%s3 + $0x14] sm:$0xf]
    %v631 = vld [vmem:[%s3 + $0x18] sm:$0xf]
    %v632 = vld [vmem:[%s3 + $0x1c] sm:$0xf]
    %v633 = vld [vmem:[%s3 + $0x20] sm:$0xf]
    %v634 = vld [vmem:[%s3 + $0x24] sm:$0xf]
    %v635 = vld [vmem:[%s3 + $0x28] sm:$0xf]
    %v636 = vld [vmem:[%s3 + $0x2c] sm:$0xf]
    %v637 = vld [vmem:[%s3 + $0x30] sm:$0xf]
    %v638 = vld [vmem:[%s3 + $0x34] sm:$0xf]
    %v639 = vld [vmem:[%s3 + $0x38] sm:$0xf]
    %v640 = vld [vmem:[%s3 + $0x3c] sm:$0xf]
    %v641 = vld [vmem:[%s4] sm:$0x1]
    %v643 = vlaneseq
    %v644 = vshrl.u32 %v643, 7
    %v645 = vsub.s32 0, %v644
    %v646 = vrot.slane %v641, %v645
    %v664 = vunpack.c.l.b16 %v625
    %v665 = vunpack.c.l.b16 %v626
    %v666 = vunpack.c.l.b16 %v627
    %v667 = vunpack.c.l.b16 %v628
    %v668 = vunpack.c.l.b16 %v629
    %v669 = vunpack.c.l.b16 %v630
    %v670 = vunpack.c.l.b16 %v631
    %v671 = vunpack.c.l.b16 %v632
    %v672 = vunpack.c.l.b16 %v633
    %v673 = vunpack.c.l.b16 %v634
    %v674 = vunpack.c.l.b16 %v635
    %v675 = vunpack.c.l.b16 %v636
    %v676 = vunpack.c.l.b16 %v637
    %v677 = vunpack.c.l.b16 %v638
    %v678 = vunpack.c.l.b16 %v639
    %v679 = vunpack.c.l.b16 %v640
    %v680 = vpack.c.b16 %v665, %v664
    %v681 = vpack.c.b16 %v667, %v666
    %v682 = vpack.c.b16 %v669, %v668
    %v683 = vpack.c.b16 %v671, %v670
    %v684 = vpack.c.b16 %v673, %v672
    %v685 = vpack.c.b16 %v675, %v674
    %v686 = vpack.c.b16 %v677, %v676
    %v687 = vpack.c.b16 %v679, %v678
    %696 = vmatprep.subr.bf16.mxu0 0
    %697 = vmatpush1.bf16.msra.mxu0 %v680
    %698 = vmatprep.subr.bf16.mxu0 0
    %699 = vmatpush1.bf16.msra.mxu0 %v681
    %700 = vmatprep.subr.bf16.mxu0 0
    %701 = vmatpush1.bf16.msra.mxu0 %v682
    %702 = vmatprep.subr.bf16.mxu0 0
    %703 = vmatpush1.bf16.msra.mxu0 %v683
    %704 = vmatprep.subr.bf16.mxu0 0
    %705 = vmatpush1.bf16.msra.mxu0 %v684
    %706 = vmatprep.subr.bf16.mxu0 0
    %707 = vmatpush1.bf16.msra.mxu0 %v685
    %708 = vmatprep.subr.bf16.mxu0 0
    %709 = vmatpush1.bf16.msra.mxu0 %v686
    %710 = vmatprep.subr.bf16.mxu0 0
    %711 = vmatpush1.bf16.msra.mxu0 %v687
    %712 = vmatprep.subr.bf16.mxu0 0
    %713 = vmatpush1.bf16.msra.mxu0 0
    %714 = vmatprep.subr.bf16.mxu0 0
    %715 = vmatpush1.bf16.msra.mxu0 0
    %716 = vmatprep.subr.bf16.mxu0 0
    %717 = vmatpush1.bf16.msra.mxu0 0
    %718 = vmatprep.subr.bf16.mxu0 0
    %719 = vmatpush1.bf16.msra.mxu0 0
    %720 = vmatprep.subr.bf16.mxu0 0
    %721 = vmatpush1.bf16.msra.mxu0 0
    %722 = vmatprep.subr.bf16.mxu0 0
    %723 = vmatpush1.bf16.msra.mxu0 0
    %724 = vmatprep.subr.bf16.mxu0 0
    %725 = vmatpush1.bf16.msra.mxu0 0
    %726 = vmatprep.subr.bf16.mxu0 0
    %727 = vmatpush1.bf16.msra.mxu0 0
    %728 = vmatprep.mubr.bf16.mxu0 0
    %729 = vmatmul.mubr.bf16.gmra.mrb[0].mxu0 %v624
    %v730 = vpop.f32.mrb[0].mxu0
    %v731 = vadd.f32 %v646, %v730
    %v732 = vpop.f32.mrb[0].mxu0
    %v733 = vpop.f32.mrb[0].mxu0
    %v734 = vadd.f32 %v646, %v733
    %v735 = vpop.f32.mrb[0].mxu0
    %736 = vdwg.mxu0
    %v737 = vmax.f32 %v731, 0.0
    %v738 = vmax.f32 %v734, 0.0
    %v739 = vpack.c.bf16 %v738, %v737
    %v740 = vld [vmem:[%s5] sm:$0xf]
    %v741 = vld [vmem:[%s5 + $0x4] sm:$0xf]
    %v742 = vld [vmem:[%s5 + $0x8] sm:$0xf]
    %v743 = vld [vmem:[%s5 + $0xc] sm:$0xf]
    %v744 = vld [vmem:[%s5 + $0x10] sm:$0xf]
    %v745 = vld [vmem:[%s5 + $0x14] sm:$0xf]
    %v746 = vld [vmem:[%s5 + $0x18] sm:$0xf]
    %v747 = vld [vmem:[%s5 + $0x1c] sm:$0xf]
    %v748 = vld [vmem:[%s5 + $0x20] sm:$0xf]
    %v749 = vld [vmem:[%s5 + $0x24] sm:$0xf]
    %v750 = vld [vmem:[%s5 + $0x28] sm:$0xf]
    %v751 = vld [vmem:[%s5 + $0x2c] sm:$0xf]
    %v752 = vld [vmem:[%s5 + $0x30] sm:$0xf]
    %v753 = vld [vmem:[%s5 + $0x34] sm:$0xf]
    %v754 = vld [vmem:[%s5 + $0x38] sm:$0xf]
    %v755 = vld [vmem:[%s5 + $0x3c] sm:$0xf]
    %v756 = vld [vmem:[%s6] sm:$0x1]
    %v758 = vlaneseq
    %v759 = vshrl.u32 %v758, 7
    %v760 = vsub.s32 0, %v759
    %v761 = vrot.slane %v756, %v760
    %v779 = vunpack.c.l.b16 %v740
    %v780 = vunpack.c.l.b16 %v741
    %v781 = vunpack.c.l.b16 %v742
    %v782 = vunpack.c.l.b16 %v743
    %v783 = vunpack.c.l.b16 %v744
    %v784 = vunpack.c.l.b16 %v745
    %v785 = vunpack.c.l.b16 %v746
    %v786 = vunpack.c.l.b16 %v747
    %v787 = vunpack.c.l.b16 %v748
    %v788 = vunpack.c.l.b16 %v749
    %v789 = vunpack.c.l.b16 %v750
    %v790 = vunpack.c.l.b16 %v751
    %v791 = vunpack.c.l.b16 %v752
    %v792 = vunpack.c.l.b16 %v753
    %v793 = vunpack.c.l.b16 %v754
    %v794 = vunpack.c.l.b16 %v755
    %v795 = vpack.c.b16 %v780, %v779
    %v796 = vpack.c.b16 %v782, %v781
    %v797 = vpack.c.b16 %v784, %v783
    %v798 = vpack.c.b16 %v786, %v785
    %v799 = vpack.c.b16 %v788, %v787
    %v800 = vpack.c.b16 %v790, %v789
    %v801 = vpack.c.b16 %v792, %v791
    %v802 = vpack.c.b16 %v794, %v793
    %811 = vmatprep.subr.bf16.mxu0 0
    %812 = vmatpush1.bf16.msra.mxu0 %v795
    %813 = vmatprep.subr.bf16.mxu0 0
    %814 = vmatpush1.bf16.msra.mxu0 %v796
    %815 = vmatprep.subr.bf16.mxu0 0
    %816 = vmatpush1.bf16.msra.mxu0 %v797
    %817 = vmatprep.subr.bf16.mxu0 0
    %818 = vmatpush1.bf16.msra.mxu0 %v798
    %819 = vmatprep.subr.bf16.mxu0 0
    %820 = vmatpush1.bf16.msra.mxu0 %v799
    %821 = vmatprep.subr.bf16.mxu0 0
    %822 = vmatpush1.bf16.msra.mxu0 %v800
    %823 = vmatprep.subr.bf16.mxu0 0
    %824 = vmatpush1.bf16.msra.mxu0 %v801
    %825 = vmatprep.subr.bf16.mxu0 0
    %826 = vmatpush1.bf16.msra.mxu0 %v802
    %827 = vmatprep.subr.bf16.mxu0 0
    %828 = vmatpush1.bf16.msra.mxu0 0
    %829 = vmatprep.subr.bf16.mxu0 0
    %830 = vmatpush1.bf16.msra.mxu0 0
    %831 = vmatprep.subr.bf16.mxu0 0
    %832 = vmatpush1.bf16.msra.mxu0 0
    %833 = vmatprep.subr.bf16.mxu0 0
    %834 = vmatpush1.bf16.msra.mxu0 0
    %835 = vmatprep.subr.bf16.mxu0 0
    %836 = vmatpush1.bf16.msra.mxu0 0
    %837 = vmatprep.subr.bf16.mxu0 0
    %838 = vmatpush1.bf16.msra.mxu0 0
    %839 = vmatprep.subr.bf16.mxu0 0
    %840 = vmatpush1.bf16.msra.mxu0 0
    %841 = vmatprep.subr.bf16.mxu0 0
    %842 = vmatpush1.bf16.msra.mxu0 0
    %843 = vmatprep.mubr.bf16.mxu0 0
    %844 = vmatmul.mubr.bf16.gmra.mrb[0].mxu0 %v739
    %v845 = vpop.f32.mrb[0].mxu0
    %v846 = vadd.f32 %v761, %v845
    %v847 = vpop.f32.mrb[0].mxu0
    %v848 = vpop.f32.mrb[0].mxu0
    %v849 = vadd.f32 %v761, %v848
    %v850 = vpop.f32.mrb[0].mxu0
    %851 = vdwg.mxu0
    %v852 = vmax.f32 %v846, 0.0
    %v853 = vmax.f32 %v849, 0.0
    %v854 = vpack.c.bf16 %v853, %v852
    %v855 = vld [vmem:[%s7] sm:$0xf]
    %v856 = vld [vmem:[%s7 + $0x4] sm:$0xf]
    %v857 = vld [vmem:[%s7 + $0x8] sm:$0xf]
    %v858 = vld [vmem:[%s7 + $0xc] sm:$0xf]
    %v859 = vld [vmem:[%s7 + $0x10] sm:$0xf]
    %v860 = vld [vmem:[%s7 + $0x14] sm:$0xf]
    %v861 = vld [vmem:[%s7 + $0x18] sm:$0xf]
    %v862 = vld [vmem:[%s7 + $0x1c] sm:$0xf]
    %v863 = vld [vmem:[%s7 + $0x20] sm:$0xf]
    %v864 = vld [vmem:[%s7 + $0x24] sm:$0xf]
    %v865 = vld [vmem:[%s7 + $0x28] sm:$0xf]
    %v866 = vld [vmem:[%s7 + $0x2c] sm:$0xf]
    %v867 = vld [vmem:[%s7 + $0x30] sm:$0xf]
    %v868 = vld [vmem:[%s7 + $0x34] sm:$0xf]
    %v869 = vld [vmem:[%s7 + $0x38] sm:$0xf]
    %v870 = vld [vmem:[%s7 + $0x3c] sm:$0xf]
    %v871 = vld [vmem:[%s8] sm:$0x1]
    %v873 = vlaneseq
    %v874 = vshrl.u32 %v873, 7
    %v875 = vsub.s32 0, %v874
    %v876 = vrot.slane %v871, %v875
    %v894 = vunpack.c.l.b16 %v855
    %v895 = vunpack.c.l.b16 %v856
    %v896 = vunpack.c.l.b16 %v857
    %v897 = vunpack.c.l.b16 %v858
    %v898 = vunpack.c.l.b16 %v859
    %v899 = vunpack.c.l.b16 %v860
    %v900 = vunpack.c.l.b16 %v861
    %v901 = vunpack.c.l.b16 %v862
    %v902 = vunpack.c.l.b16 %v863
    %v903 = vunpack.c.l.b16 %v864
    %v904 = vunpack.c.l.b16 %v865
    %v905 = vunpack.c.l.b16 %v866
    %v906 = vunpack.c.l.b16 %v867
    %v907 = vunpack.c.l.b16 %v868
    %v908 = vunpack.c.l.b16 %v869
    %v909 = vunpack.c.l.b16 %v870
    %v910 = vpack.c.b16 %v895, %v894
    %v911 = vpack.c.b16 %v897, %v896
    %v912 = vpack.c.b16 %v899, %v898
    %v913 = vpack.c.b16 %v901, %v900
    %v914 = vpack.c.b16 %v903, %v902
    %v915 = vpack.c.b16 %v905, %v904
    %v916 = vpack.c.b16 %v907, %v906
    %v917 = vpack.c.b16 %v909, %v908
    %926 = vmatprep.subr.bf16.mxu0 0
    %927 = vmatpush1.bf16.msra.mxu0 %v910
    %928 = vmatprep.subr.bf16.mxu0 0
    %929 = vmatpush1.bf16.msra.mxu0 %v911
    %930 = vmatprep.subr.bf16.mxu0 0
    %931 = vmatpush1.bf16.msra.mxu0 %v912
    %932 = vmatprep.subr.bf16.mxu0 0
    %933 = vmatpush1.bf16.msra.mxu0 %v913
    %934 = vmatprep.subr.bf16.mxu0 0
    %935 = vmatpush1.bf16.msra.mxu0 %v914
    %936 = vmatprep.subr.bf16.mxu0 0
    %937 = vmatpush1.bf16.msra.mxu0 %v915
    %938 = vmatprep.subr.bf16.mxu0 0
    %939 = vmatpush1.bf16.msra.mxu0 %v916
    %940 = vmatprep.subr.bf16.mxu0 0
    %941 = vmatpush1.bf16.msra.mxu0 %v917
    %942 = vmatprep.subr.bf16.mxu0 0
    %943 = vmatpush1.bf16.msra.mxu0 0
    %944 = vmatprep.subr.bf16.mxu0 0
    %945 = vmatpush1.bf16.msra.mxu0 0
    %946 = vmatprep.subr.bf16.mxu0 0
    %947 = vmatpush1.bf16.msra.mxu0 0
    %948 = vmatprep.subr.bf16.mxu0 0
    %949 = vmatpush1.bf16.msra.mxu0 0
    %950 = vmatprep.subr.bf16.mxu0 0
    %951 = vmatpush1.bf16.msra.mxu0 0
    %952 = vmatprep.subr.bf16.mxu0 0
    %953 = vmatpush1.bf16.msra.mxu0 0
    %954 = vmatprep.subr.bf16.mxu0 0
    %955 = vmatpush1.bf16.msra.mxu0 0
    %956 = vmatprep.subr.bf16.mxu0 0
    %957 = vmatpush1.bf16.msra.mxu0 0
    %958 = vmatprep.mubr.bf16.mxu0 0
    %959 = vmatmul.mubr.bf16.gmra.mrb[0].mxu0 %v854
    %v960 = vpop.f32.mrb[0].mxu0
    %v961 = vadd.f32 %v876, %v960
    %v962 = vpop.f32.mrb[0].mxu0
    %v963 = vpop.f32.mrb[0].mxu0
    %v964 = vadd.f32 %v876, %v963
    %v965 = vpop.f32.mrb[0].mxu0
    %966 = vdwg.mxu0
    %v967 = vlaneseq
    %v968 = vand.u32 %v967, 127
    %vm969 = vcmp.lt.s32.totalorder %v968, 10
    %v970 = vsel %vm969, %v961, -1e+30
    %v971 = vsel %vm969, %v964, -1e+30
    %972 = vmax.xlane.f32.xlu0 %v970
    %v973 = vpop.xlane.xlu0 %972
    %974 = vmax.xlane.f32.xlu0 %v971
    %v975 = vpop.xlane.xlu0 %974
    %v976 = vsub.f32 %v970, %v973
    %v977 = vsub.f32 %v971, %v975
    %v978 = vmul.f32 %v976, 1.442695
    %v979 = vpow.pop %v978
    %v980 = vmul.f32 %v977, 1.442695
    %v981 = vpow.pop %v980
    %982 = vadd.xlane.f32.xlu0 %v979
    %v983 = vpop.xlane.xlu0 %982
    %984 = vadd.xlane.f32.xlu0 %v981
    %v985 = vpop.xlane.xlu0 %984
    %v986 = vlog2.pop %v983
    %v987 = vmul.f32 %v986, 0.6931472
    %v988 = vlog2.pop %v985
    %v989 = vmul.f32 %v988, 0.6931472
    %v990 = vsub.f32 %v976, %v987
    %v991 = vsub.f32 %v977, %v989
    %v992 = vsel %vm969, %v990, 0.0
    %v993 = vsel %vm969, %v991, 0.0
    %v994 = vpack.c.bf16 %v993, %v992
    %v996 = vunpack.c.l.b16 %v994
    %v997 = vunpack.c.h.b16 %v994
    %v998 = vpack.c.b16 %v996, %v996
    %v999 = vpack.c.b16 %v997, %v997
    %1002 = vst [vmem:[#allocation2] sm:$0xf] %v998
    %1003 = vst [vmem:[#allocation2 + $0x4] sm:$0xf] %v999
    // Predicated region
    $region38: #{mlp_forward.1} parent=1 // pred_check
      _
    $region39: #{mlp_forward.1} parent=1 // pred_check_branch
      %1005 = sbr.rel (0) target = $region41
    $region40: #{mlp_forward.1} parent=1 // pred_region
      %s1007 = ssub.s32 128, 64
      %1008 = vsyncadd [#allocation3], %s1007
      %s1009 = sshll.u32 [#allocation2], 4
      %s1010 = int_to_ptr.vmem [resolvable:$true] %s1009
      %1015 = dma.vmem_to_hbm [thread:$0]  %s1010, 64, %s9, [#allocation3], 64, 64, 4
    $region41: #{mlp_forward.1} parent=1 // pred_fallthru
      _
    // Predicated region
    $region42: #{mlp_forward.1} parent=1 // pred_check
      _
    $region43: #{mlp_forward.1} parent=1 // pred_check_branch
      %1017 = sbr.rel (0) target = $region45
    $region44: #{mlp_forward.1} parent=1 // pred_region
      %1018 = dma.done [#allocation3], 128
    $region45: #{mlp_forward.1} parent=1 // pred_fallthru
      _
    %1019 = vsyncpa [#allocation3], 1

</llo_original>
